<compile_context>
chip_gen: v5e
topology: v5e:2x2
jax: 0.10.0
libtpu: 0.0.40
codegen_flags: <defaults>
</compile_context>

<pallas_src>
import functools
import math

import jax
import jax.numpy as jnp
from jax.experimental import pallas as pl
from jax.experimental.pallas import tpu as pltpu

_LANE = 128


def _embeddings_kernel(x_ref, w_ref, b_ref, o_ref, *, scale, precision):
    # x_ref: (TM, K) f32   w_ref: (TN, K) f32 (PyTorch (out, in) layout)
    # b_ref: (1, TN) f32   o_ref: (TM, TN)
    out = jax.lax.dot_general(
        x_ref[...], w_ref[...],
        dimension_numbers=(((1,), (1,)), ((), ())),   # x @ W.T, no HBM transpose
        preferred_element_type=jnp.float32,           # f32 accumulation on MXU
        precision=precision,
    )
    out = (out + b_ref[...]) * scale                  # fused bias + sqrt(d) (VPU)
    o_ref[...] = out.astype(o_ref.dtype)


def _round_up(x, m):
    return ((x + m - 1) // m) * m


def _vmem_budget_bytes():
    try:
        cap = int(pltpu.get_tpu_info().vmem_capacity_bytes)
    except Exception:
        cap = 64 << 20                      # conservative: v7x per-TC VMEM
    budget = min(cap - (16 << 20), int(cap * 0.75))   # leave compiler headroom
    return cap, max(budget, 8 << 20)


def _working_set_bytes(tm, tn, k, w_bufs=2):
    f32 = 4
    return (2 * tm * k * f32            # x block, double buffered
            + w_bufs * tn * k * f32     # weight block
            + w_bufs * tn * f32         # bias block
            + 2 * tm * tn * f32)        # output block, double buffered


def _choose_tiles(m, k, n_pad, budget):
    """Pick (TM, TN): lane-dense TN (mult of 128) and a big TM within budget."""
    tm_candidates = [t for t in (2048, 1024, 512, 256, 128, 64, 32, 16, 8)
                     if t <= m]
    if not tm_candidates:
        tm_candidates = [m]               # m < 8: block spans full row axis
    tn = min(n_pad, 512)
    while True:
        for tm in tm_candidates:
            if _working_set_bytes(tm, tn, k) <= budget:
                return tm, tn
        if tn > _LANE:
            tn -= _LANE
        else:
            return tm_candidates[-1], tn


def embeddings_forward(x, weight, bias, *, out_dtype=jnp.float32):
    """Fused forward of the PyTorch `Embeddings` module.

    x: (..., dim_in); weight: (dim_d, dim_in) (nn.Linear layout, used as-is);
    bias: (dim_d,).  Returns (..., dim_d) in `out_dtype`.
    """
    *lead, K = x.shape
    N = weight.shape[0]
    scale = math.sqrt(float(N))

    M = 1
    for d in lead:
        M *= d

    # x.float() semantics from the module: run the matmul in f32.  (No-op cast
    # for f32 inputs; if callers deliberately want the bf16 MXU fast path they
    # should skip this module's upcast semantics entirely.)
    x2 = x.reshape(M, K).astype(jnp.float32)
    w = weight.astype(jnp.float32)
    b = bias.astype(jnp.float32)

    # Pad dim_d to a multiple of 128 so the output lane axis is dense
    # (unmasked vst); padded columns are zero and sliced off below.
    N_pad = _round_up(N, _LANE)
    if N_pad != N:
        w = jnp.pad(w, ((0, N_pad - N), (0, 0)))
        b = jnp.pad(b, (0, N_pad - N))
    b2 = b.reshape(1, N_pad)

    vmem_cap, budget = _vmem_budget_bytes()
    TM, TN = _choose_tiles(M, K, N_pad, budget)
    grid_m = pl.cdiv(M, TM)
    grid_n = pl.cdiv(N_pad, TN)
    grid = (grid_m, grid_n)               # j (N tiles) is the fastest axis

    working = _working_set_bytes(TM, TN, K)
    vmem_limit = int(min(vmem_cap, max(working + (8 << 20), 32 << 20)))

    cost = pl.CostEstimate(
        flops=2 * M * K * N_pad + 2 * M * N_pad,
        transcendentals=0,
        bytes_accessed=4 * (M * K + N_pad * K + N_pad)
        + jnp.dtype(out_dtype).itemsize * M * N_pad,
    )

    def build(single_buffer_resident, precision):
        kernel = functools.partial(_embeddings_kernel, scale=scale,
                                   precision=precision)
        if single_buffer_resident:
            # Constant index map (grid_n == 1): one VMEM buffer is enough,
            # halving the resident weight footprint.
            w_spec = pl.BlockSpec((TN, K), lambda i, j: (j, 0),
                                  pipeline_mode=pl.Buffered(1))
            b_spec = pl.BlockSpec((1, TN), lambda i, j: (0, j),
                                  pipeline_mode=pl.Buffered(1))
        else:
            # Streaming weight tiles: keep default double buffering so the
            # next tile's DMA overlaps compute.
            w_spec = pl.BlockSpec((TN, K), lambda i, j: (j, 0))
            b_spec = pl.BlockSpec((1, TN), lambda i, j: (0, j))
        return pl.pallas_call(
            kernel,
            out_shape=jax.ShapeDtypeStruct((M, N_pad), out_dtype),
            grid_spec=pltpu.PrefetchScalarGridSpec(
                num_scalar_prefetch=0,
                grid=grid,
                in_specs=[
                    pl.BlockSpec((TM, K), lambda i, j: (i, 0)),  # x (reused over j)
                    w_spec,                                      # weight tile
                    b_spec,                                      # bias tile
                ],
                out_specs=pl.BlockSpec((TM, TN), lambda i, j: (i, j)),
            ),
            compiler_params=pltpu.CompilerParams(
                dimension_semantics=("parallel", "parallel"),
                vmem_limit_bytes=vmem_limit,
            ),
            cost_estimate=cost,
        )

    # Preference ladder: bit-faithful f32 matmul (HIGHEST) and single-buffered
    # resident weight first; fall back gracefully if this JAX/Mosaic build
    # rejects either knob so the kernel always runs.
    sb_options = [True, False] if grid_n == 1 else [False]
    attempts = [(prec, sb)
                for prec in (jax.lax.Precision.HIGHEST, None)
                for sb in sb_options]

    out2 = None
    last_err = None
    for prec, sb in attempts:
        try:
            out2 = build(sb, prec)(x2, w, b2)
            break
        except Exception as err:   # unsupported pipeline_mode / precision knob
            last_err = err
    if out2 is None:
        raise last_err

    if N_pad != N:
        out2 = out2[:, :N]
    return out2.reshape(*lead, N)


def _reference(x, weight, bias):
    """Pure-JAX reference reproducing the PyTorch forward."""
    d_model = weight.shape[0]
    y = jnp.einsum("...k,nk->...n",
                   x.astype(jnp.float32), weight.astype(jnp.float32),
                   precision=jax.lax.Precision.HIGHEST) + bias.astype(jnp.float32)
    return y * math.sqrt(float(d_model))


if __name__ == "__main__":
    # Small shapes consistent with the module: batch=2, seq=8, dim_in=16, dim_d=32
    B, S, dim_in, dim_d = 2, 8, 16, 32

    key = jax.random.PRNGKey(0)
    k1, k2, k3 = jax.random.split(key, 3)

    x = jax.random.normal(k1, (B, S, dim_in), jnp.float32)
    weight = jax.random.normal(k2, (dim_d, dim_in), jnp.float32) * 0.1  # nn.Linear.weight
    bias = jax.random.normal(k3, (dim_d,), jnp.float32) * 0.1           # nn.Linear.bias

    out = embeddings_forward(x, weight, bias)
    out = jax.block_until_ready(out)

    ref = _reference(x, weight, bias)
    assert out.shape == ref.shape, (out.shape, ref.shape)
    assert jnp.allclose(out, ref, atol=1e-5, rtol=1e-5), "mismatch vs reference"

    print("KERNEL_OK")
</pallas_src>

<mosaic_0001>
module attributes {stable_mosaic.version = 11 : i64} {
  func.func @_embeddings_kernel(%arg0: i32, %arg1: i32, %arg2: memref<16x16xf32, #tpu.memory_space<vmem>>, %arg3: memref<128x16xf32, #tpu.memory_space<vmem>>, %arg4: memref<1x128xf32, #tpu.memory_space<vmem>>, %arg5: memref<16x128xf32, #tpu.memory_space<vmem>>) attributes {dimension_semantics = [#tpu.dimension_semantics<parallel>, #tpu.dimension_semantics<parallel>], iteration_bounds = array<i64: 1, 1>, scalar_prefetch = 0 : i64, scratch_operands = 0 : i64, tpu.core_type = #tpu.core_type<tc>, window_params = [{transform_indices = @transform_0, window_bounds = array<i64: 16, 16>}, {pipeline_mode = #tpu.pipeline_mode<synchronous>, transform_indices = @transform_1, window_bounds = array<i64: 128, 16>}, {pipeline_mode = #tpu.pipeline_mode<synchronous>, transform_indices = @transform_2, window_bounds = array<i64: 1, 128>}, {transform_indices = @transform_3, window_bounds = array<i64: 16, 128>}]} {
    %c0 = arith.constant 0 : index
    %c0_0 = arith.constant 0 : index
    %0 = vector.load %arg2[%c0, %c0_0] : memref<16x16xf32, #tpu.memory_space<vmem>>, vector<16x16xf32>
    %c0_1 = arith.constant 0 : index
    %c0_2 = arith.constant 0 : index
    %1 = vector.load %arg3[%c0_1, %c0_2] : memref<128x16xf32, #tpu.memory_space<vmem>>, vector<128x16xf32>
    %cst = arith.constant dense<0.000000e+00> : vector<16x128xf32>
    %2 = tpu.matmul %0, %1, %cst {dimension_numbers = #tpu.dot_dimension_numbers<[1], [1], [0], [0], [0, 0, 1, 0], [], []>, precision = #tpu.contract_precision<fp32>} : vector<16x16xf32>, vector<128x16xf32>, vector<16x128xf32> -> vector<16x128xf32>
    %c0_3 = arith.constant 0 : index
    %c0_4 = arith.constant 0 : index
    %3 = vector.load %arg4[%c0_3, %c0_4] : memref<1x128xf32, #tpu.memory_space<vmem>>, vector<1x128xf32>
    %4 = vector.broadcast %3 : vector<1x128xf32> to vector<16x128xf32>
    %5 = arith.addf %2, %4 : vector<16x128xf32>
    %cst_5 = arith.constant 5.65685415 : f32
    %6 = vector.broadcast %cst_5 : f32 to vector<16x128xf32>
    %7 = arith.mulf %5, %6 : vector<16x128xf32>
    %c0_6 = arith.constant 0 : index
    %c0_7 = arith.constant 0 : index
    %8 = vector.load %arg5[%c0_6, %c0_7] : memref<16x128xf32, #tpu.memory_space<vmem>>, vector<16x128xf32>
    tpu.vector_store %arg5[%c0_6, %c0_7], %7 {strides = array<i32>} : memref<16x128xf32, #tpu.memory_space<vmem>>, vector<16x128xf32>,
    return
  }
  func.func @transform_0(%arg0: i32, %arg1: i32) -> (i32, i32) {
    %c0_i32 = arith.constant 0 : i32
    %c0_i32_0 = arith.constant 0 : i32
    return %arg0, %c0_i32 : i32, i32
  }
  func.func @transform_1(%arg0: i32, %arg1: i32) -> (i32, i32) {
    %c0_i32 = arith.constant 0 : i32
    %c0_i32_0 = arith.constant 0 : i32
    return %arg1, %c0_i32 : i32, i32
  }
  func.func @transform_2(%arg0: i32, %arg1: i32) -> (i32, i32) {
    %c0_i32 = arith.constant 0 : i32
    %c0_i32_0 = arith.constant 0 : i32
    return %c0_i32, %arg1 : i32, i32
  }
  func.func @transform_3(%arg0: i32, %arg1: i32) -> (i32, i32) {
    %c0_i32 = arith.constant 0 : i32
    return %arg0, %arg1 : i32, i32
  }
}

module attributes {stable_mosaic.version = 11 : i64} {
  func.func @_embeddings_kernel(%arg0: i32, %arg1: i32, %arg2: memref<16x16xf32, #tpu.memory_space<vmem>>, %arg3: memref<128x16xf32, #tpu.memory_space<vmem>>, %arg4: memref<1x128xf32, #tpu.memory_space<vmem>>, %arg5: memref<16x128xf32, #tpu.memory_space<vmem>>) attributes {dimension_semantics = [#tpu.dimension_semantics<parallel>, #tpu.dimension_semantics<parallel>], iteration_bounds = array<i64: 1, 1>, scalar_prefetch = 0 : i64, scratch_operands = 0 : i64, tpu.core_type = #tpu.core_type<tc>, window_params = [{transform_indices = @transform_0, window_bounds = array<i64: 16, 16>}, {transform_indices = @transform_1, window_bounds = array<i64: 128, 16>}, {transform_indices = @transform_2, window_bounds = array<i64: 1, 128>}, {transform_indices = @transform_3, window_bounds = array<i64: 16, 128>}]} {
    %c0 = arith.constant 0 : index
    %c0_0 = arith.constant 0 : index
    %0 = vector.load %arg2[%c0, %c0_0] : memref<16x16xf32, #tpu.memory_space<vmem>>, vector<16x16xf32>
    %c0_1 = arith.constant 0 : index
    %c0_2 = arith.constant 0 : index
    %1 = vector.load %arg3[%c0_1, %c0_2] : memref<128x16xf32, #tpu.memory_space<vmem>>, vector<128x16xf32>
    %cst = arith.constant dense<0.000000e+00> : vector<16x128xf32>
    %2 = tpu.matmul %0, %1, %cst {dimension_numbers = #tpu.dot_dimension_numbers<[1], [1], [0], [0], [0, 0, 1, 0], [], []>, precision = #tpu.contract_precision<fp32>} : vector<16x16xf32>, vector<128x16xf32>, vector<16x128xf32> -> vector<16x128xf32>
    %c0_3 = arith.constant 0 : index
    %c0_4 = arith.constant 0 : index
    %3 = vector.load %arg4[%c0_3, %c0_4] : memref<1x128xf32, #tpu.memory_space<vmem>>, vector<1x128xf32>
    %4 = vector.broadcast %3 : vector<1x128xf32> to vector<16x128xf32>
    %5 = arith.addf %2, %4 : vector<16x128xf32>
    %cst_5 = arith.constant 5.65685415 : f32
    %6 = vector.broadcast %cst_5 : f32 to vector<16x128xf32>
    %7 = arith.mulf %5, %6 : vector<16x128xf32>
    %c0_6 = arith.constant 0 : index
    %c0_7 = arith.constant 0 : index
    %8 = vector.load %arg5[%c0_6, %c0_7] : memref<16x128xf32, #tpu.memory_space<vmem>>, vector<16x128xf32>
    tpu.vector_store %arg5[%c0_6, %c0_7], %7 {strides = array<i32>} : memref<16x128xf32, #tpu.memory_space<vmem>>, vector<16x128xf32>,
    return
  }
  func.func @transform_0(%arg0: i32, %arg1: i32) -> (i32, i32) {
    %c0_i32 = arith.constant 0 : i32
    %c0_i32_0 = arith.constant 0 : i32
    return %arg0, %c0_i32 : i32, i32
  }
  func.func @transform_1(%arg0: i32, %arg1: i32) -> (i32, i32) {
    %c0_i32 = arith.constant 0 : i32
    %c0_i32_0 = arith.constant 0 : i32
    return %arg1, %c0_i32 : i32, i32
  }
  func.func @transform_2(%arg0: i32, %arg1: i32) -> (i32, i32) {
    %c0_i32 = arith.constant 0 : i32
    %c0_i32_0 = arith.constant 0 : i32
    return %c0_i32, %arg1 : i32, i32
  }
  func.func @transform_3(%arg0: i32, %arg1: i32) -> (i32, i32) {
    %c0_i32 = arith.constant 0 : i32
    return %arg0, %arg1 : i32, i32
  }
}

module attributes {stable_mosaic.version = 11 : i64} {
  func.func @_embeddings_kernel(%arg0: i32, %arg1: i32, %arg2: memref<16x16xf32, #tpu.memory_space<vmem>>, %arg3: memref<128x16xf32, #tpu.memory_space<vmem>>, %arg4: memref<1x128xf32, #tpu.memory_space<vmem>>, %arg5: memref<16x128xf32, #tpu.memory_space<vmem>>) attributes {dimension_semantics = [#tpu.dimension_semantics<parallel>, #tpu.dimension_semantics<parallel>], iteration_bounds = array<i64: 1, 1>, scalar_prefetch = 0 : i64, scratch_operands = 0 : i64, tpu.core_type = #tpu.core_type<tc>, window_params = [{transform_indices = @transform_0, window_bounds = array<i64: 16, 16>}, {pipeline_mode = #tpu.pipeline_mode<synchronous>, transform_indices = @transform_1, window_bounds = array<i64: 128, 16>}, {pipeline_mode = #tpu.pipeline_mode<synchronous>, transform_indices = @transform_2, window_bounds = array<i64: 1, 128>}, {transform_indices = @transform_3, window_bounds = array<i64: 16, 128>}]} {
    %c0 = arith.constant 0 : index
    %c0_0 = arith.constant 0 : index
    %0 = vector.load %arg2[%c0, %c0_0] : memref<16x16xf32, #tpu.memory_space<vmem>>, vector<16x16xf32>
    %c0_1 = arith.constant 0 : index
    %c0_2 = arith.constant 0 : index
    %1 = vector.load %arg3[%c0_1, %c0_2] : memref<128x16xf32, #tpu.memory_space<vmem>>, vector<128x16xf32>
    %cst = arith.constant dense<0.000000e+00> : vector<16x128xf32>
    %2 = tpu.matmul %0, %1, %cst {dimension_numbers = #tpu.dot_dimension_numbers<[1], [1], [0], [0], [0, 0, 1, 0], [], []>} : vector<16x16xf32>, vector<128x16xf32>, vector<16x128xf32> -> vector<16x128xf32>
    %c0_3 = arith.constant 0 : index
    %c0_4 = arith.constant 0 : index
    %3 = vector.load %arg4[%c0_3, %c0_4] : memref<1x128xf32, #tpu.memory_space<vmem>>, vector<1x128xf32>
    %4 = vector.broadcast %3 : vector<1x128xf32> to vector<16x128xf32>
    %5 = arith.addf %2, %4 : vector<16x128xf32>
    %cst_5 = arith.constant 5.65685415 : f32
    %6 = vector.broadcast %cst_5 : f32 to vector<16x128xf32>
    %7 = arith.mulf %5, %6 : vector<16x128xf32>
    %c0_6 = arith.constant 0 : index
    %c0_7 = arith.constant 0 : index
    %8 = vector.load %arg5[%c0_6, %c0_7] : memref<16x128xf32, #tpu.memory_space<vmem>>, vector<16x128xf32>
    tpu.vector_store %arg5[%c0_6, %c0_7], %7 {strides = array<i32>} : memref<16x128xf32, #tpu.memory_space<vmem>>, vector<16x128xf32>,
    return
  }
  func.func @transform_0(%arg0: i32, %arg1: i32) -> (i32, i32) {
    %c0_i32 = arith.constant 0 : i32
    %c0_i32_0 = arith.constant 0 : i32
    return %arg0, %c0_i32 : i32, i32
  }
  func.func @transform_1(%arg0: i32, %arg1: i32) -> (i32, i32) {
    %c0_i32 = arith.constant 0 : i32
    %c0_i32_0 = arith.constant 0 : i32
    return %arg1, %c0_i32 : i32, i32
  }
  func.func @transform_2(%arg0: i32, %arg1: i32) -> (i32, i32) {
    %c0_i32 = arith.constant 0 : i32
    %c0_i32_0 = arith.constant 0 : i32
    return %c0_i32, %arg1 : i32, i32
  }
  func.func @transform_3(%arg0: i32, %arg1: i32) -> (i32, i32) {
    %c0_i32 = arith.constant 0 : i32
    return %arg0, %arg1 : i32, i32
  }
}

module attributes {stable_mosaic.version = 11 : i64} {
  func.func @_embeddings_kernel(%arg0: i32, %arg1: i32, %arg2: memref<16x16xf32, #tpu.memory_space<vmem>>, %arg3: memref<128x16xf32, #tpu.memory_space<vmem>>, %arg4: memref<1x128xf32, #tpu.memory_space<vmem>>, %arg5: memref<16x128xf32, #tpu.memory_space<vmem>>) attributes {dimension_semantics = [#tpu.dimension_semantics<parallel>, #tpu.dimension_semantics<parallel>], iteration_bounds = array<i64: 1, 1>, scalar_prefetch = 0 : i64, scratch_operands = 0 : i64, tpu.core_type = #tpu.core_type<tc>, window_params = [{transform_indices = @transform_0, window_bounds = array<i64: 16, 16>}, {transform_indices = @transform_1, window_bounds = array<i64: 128, 16>}, {transform_indices = @transform_2, window_bounds = array<i64: 1, 128>}, {transform_indices = @transform_3, window_bounds = array<i64: 16, 128>}]} {
    %c0 = arith.constant 0 : index
    %c0_0 = arith.constant 0 : index
    %0 = vector.load %arg2[%c0, %c0_0] : memref<16x16xf32, #tpu.memory_space<vmem>>, vector<16x16xf32>
    %c0_1 = arith.constant 0 : index
    %c0_2 = arith.constant 0 : index
    %1 = vector.load %arg3[%c0_1, %c0_2] : memref<128x16xf32, #tpu.memory_space<vmem>>, vector<128x16xf32>
    %cst = arith.constant dense<0.000000e+00> : vector<16x128xf32>
    %2 = tpu.matmul %0, %1, %cst {dimension_numbers = #tpu.dot_dimension_numbers<[1], [1], [0], [0], [0, 0, 1, 0], [], []>} : vector<16x16xf32>, vector<128x16xf32>, vector<16x128xf32> -> vector<16x128xf32>
    %c0_3 = arith.constant 0 : index
    %c0_4 = arith.constant 0 : index
    %3 = vector.load %arg4[%c0_3, %c0_4] : memref<1x128xf32, #tpu.memory_space<vmem>>, vector<1x128xf32>
    %4 = vector.broadcast %3 : vector<1x128xf32> to vector<16x128xf32>
    %5 = arith.addf %2, %4 : vector<16x128xf32>
    %cst_5 = arith.constant 5.65685415 : f32
    %6 = vector.broadcast %cst_5 : f32 to vector<16x128xf32>
    %7 = arith.mulf %5, %6 : vector<16x128xf32>
    %c0_6 = arith.constant 0 : index
    %c0_7 = arith.constant 0 : index
    %8 = vector.load %arg5[%c0_6, %c0_7] : memref<16x128xf32, #tpu.memory_space<vmem>>, vector<16x128xf32>
    tpu.vector_store %arg5[%c0_6, %c0_7], %7 {strides = array<i32>} : memref<16x128xf32, #tpu.memory_space<vmem>>, vector<16x128xf32>,
    return
  }
  func.func @transform_0(%arg0: i32, %arg1: i32) -> (i32, i32) {
    %c0_i32 = arith.constant 0 : i32
    %c0_i32_0 = arith.constant 0 : i32
    return %arg0, %c0_i32 : i32, i32
  }
  func.func @transform_1(%arg0: i32, %arg1: i32) -> (i32, i32) {
    %c0_i32 = arith.constant 0 : i32
    %c0_i32_0 = arith.constant 0 : i32
    return %arg1, %c0_i32 : i32, i32
  }
  func.func @transform_2(%arg0: i32, %arg1: i32) -> (i32, i32) {
    %c0_i32 = arith.constant 0 : i32
    %c0_i32_0 = arith.constant 0 : i32
    return %c0_i32, %arg1 : i32, i32
  }
  func.func @transform_3(%arg0: i32, %arg1: i32) -> (i32, i32) {
    %c0_i32 = arith.constant 0 : i32
    return %arg0, %arg1 : i32, i32
  }
}

</mosaic_0001>

<llo_original>
// kernel: tpu_custom_call.1
$region0: #{tpu_custom_call.1}
  #allocation0 [shape = 'u32[]', space=smem, size = 0x4, offset = 0x4, fixed_abs, tag = 'smem constant byte address 0x4 - core index']
  #allocation1 [shape = 'u32[72,128]{1,0:T(1,128)}', space=vmem, size = 0x9000, scoped, tag = 'internal scratch']
  %s0 = inlined_call_operand.vmem [shape: f32[16,16], index: 0, kind: input, shape index: {}]
  %s1 = inlined_call_operand.vmem [shape: f32[128,16], index: 1, kind: input, shape index: {}]
  %s2 = inlined_call_operand.vmem [shape: f32[1,128], index: 2, kind: input, shape index: {}]
  %s3 = inlined_call_operand.hbm [shape: f32[16,128], index: 3, kind: output, shape index: {}]
  %s4 = sld [smem:[#allocation0]]
  $region22: #{tpu_custom_call.1} parent=0
    _
  %s6 = ssub.s32 1, %s4
  %s7 = scalar_select 0, %s6, %s4
  $region1: #{tpu_custom_call.1} parent=0
    #allocation2 [shape = 'u8[8192]{0}', space=vmem, size = 0x2000, scoped, tag = 'output window, operand 0, single buffered']
    #allocation3 [shape = 's32[1]{0}', space=sflag, size = 0x4, scoped, tag = 'scoped memory for tpu_custom_call.1']
    %8 = vsyncpa [#allocation3], 0
    // Predicated region
    $region2: #{tpu_custom_call.1} parent=1 // pred_check
      _
    $region3: #{tpu_custom_call.1} parent=1 // pred_check_branch
      %10 = sbr.rel (0) target = $region5
    $region4: #{tpu_custom_call.1} parent=1 // pred_region
      _
    $region5: #{tpu_custom_call.1} parent=1 // pred_fallthru
      _
    // Predicated region
    $region6: #{tpu_custom_call.1} parent=1 // pred_check
      _
    $region7: #{tpu_custom_call.1} parent=1 // pred_check_branch
      %12 = sbr.rel (0) target = $region9
    $region8: #{tpu_custom_call.1} parent=1 // pred_region
      _
    $region9: #{tpu_custom_call.1} parent=1 // pred_fallthru
      _
    // Predicated region
    $region10: #{tpu_custom_call.1} parent=1 // pred_check
      _
    $region11: #{tpu_custom_call.1} parent=1 // pred_check_branch
      %14 = sbr.rel (0) target = $region13
    $region12: #{tpu_custom_call.1} parent=1 // pred_region
      _
    $region13: #{tpu_custom_call.1} parent=1 // pred_fallthru
      _
    %v15 = vld [vmem:[%s0] sm:$0xff]
    %v16 = vld [vmem:[%s0 + $0x8] sm:$0xff]
    %v17 = vld [vmem:[%s1] sm:$0xff]
    %v18 = vld [vmem:[%s1 + $0x8] sm:$0xff]
    %v19 = vld [vmem:[%s1 + $0x10] sm:$0xff]
    %v20 = vld [vmem:[%s1 + $0x18] sm:$0xff]
    %v21 = vld [vmem:[%s1 + $0x20] sm:$0xff]
    %v22 = vld [vmem:[%s1 + $0x28] sm:$0xff]
    %v23 = vld [vmem:[%s1 + $0x30] sm:$0xff]
    %v24 = vld [vmem:[%s1 + $0x38] sm:$0xff]
    %v25 = vld [vmem:[%s1 + $0x40] sm:$0xff]
    %v26 = vld [vmem:[%s1 + $0x48] sm:$0xff]
    %v27 = vld [vmem:[%s1 + $0x50] sm:$0xff]
    %v28 = vld [vmem:[%s1 + $0x58] sm:$0xff]
    %v29 = vld [vmem:[%s1 + $0x60] sm:$0xff]
    %v30 = vld [vmem:[%s1 + $0x68] sm:$0xff]
    %v31 = vld [vmem:[%s1 + $0x70] sm:$0xff]
    %v32 = vld [vmem:[%s1 + $0x78] sm:$0xff]
    %v33 = vld [vmem:[%s2] sm:$0x1]
    %v35 = vperm.slane %v33, 0
    %vm37 = vcmask 130048
    %v39 = vsel %vm37, %v15, 0
    %v42 = vsel %vm37, %v16, 0
    %v45 = vsel %vm37, %v17, 0
    %v48 = vsel %vm37, %v18, 0
    %v51 = vsel %vm37, %v19, 0
    %v54 = vsel %vm37, %v20, 0
    %v57 = vsel %vm37, %v21, 0
    %v60 = vsel %vm37, %v22, 0
    %v63 = vsel %vm37, %v23, 0
    %v66 = vsel %vm37, %v24, 0
    %v69 = vsel %vm37, %v25, 0
    %v72 = vsel %vm37, %v26, 0
    %v75 = vsel %vm37, %v27, 0
    %v78 = vsel %vm37, %v28, 0
    %v81 = vsel %vm37, %v29, 0
    %v84 = vsel %vm37, %v30, 0
    %v87 = vsel %vm37, %v31, 0
    %v90 = vsel %vm37, %v32, 0
    %v92 = vand.u32 %v90, 4294901760
    %93 = vmatpush.xpose.msra.mxu0 %v92
    %v94 = vand.u32 %v87, 4294901760
    %95 = vmatpush.xpose.msra.mxu0 %v94
    %v96 = vand.u32 %v84, 4294901760
    %97 = vmatpush.xpose.msra.mxu0 %v96
    %v98 = vand.u32 %v81, 4294901760
    %99 = vmatpush.xpose.msra.mxu0 %v98
    %v100 = vand.u32 %v78, 4294901760
    %101 = vmatpush.xpose.msra.mxu0 %v100
    %v102 = vand.u32 %v75, 4294901760
    %103 = vmatpush.xpose.msra.mxu0 %v102
    %v104 = vand.u32 %v72, 4294901760
    %105 = vmatpush.xpose.msra.mxu0 %v104
    %v106 = vand.u32 %v69, 4294901760
    %107 = vmatpush.xpose.msra.mxu0 %v106
    %v108 = vand.u32 %v66, 4294901760
    %109 = vmatpush.xpose.msra.mxu0 %v108
    %v110 = vand.u32 %v63, 4294901760
    %111 = vmatpush.xpose.msra.mxu0 %v110
    %v112 = vand.u32 %v60, 4294901760
    %113 = vmatpush.xpose.msra.mxu0 %v112
    %v114 = vand.u32 %v57, 4294901760
    %115 = vmatpush.xpose.msra.mxu0 %v114
    %v116 = vand.u32 %v54, 4294901760
    %117 = vmatpush.xpose.msra.mxu0 %v116
    %v118 = vand.u32 %v51, 4294901760
    %119 = vmatpush.xpose.msra.mxu0 %v118
    %v120 = vand.u32 %v48, 4294901760
    %121 = vmatpush.xpose.msra.mxu0 %v120
    %v122 = vand.u32 %v45, 4294901760
    %123 = vmatpush.xpose.msra.mxu0 %v122
    %v124 = vand.u32 %v39, 4294901760
    %v125 = vsub.f32 %v39, %v124
    %v126 = vand.u32 %v125, 4294901760
    %v127 = vsub.f32 %v125, %v126
    %v128 = vand.u32 %v127, 4294901760
    %129 = vmatmul.f32.gmra.mxu0 %v128
    %v130 = vpop.f32.mrf.mxu0
    %v131 = vadd.f32 %v35, %v130
    %v132 = vand.u32 %v42, 4294901760
    %v133 = vsub.f32 %v42, %v132
    %v134 = vand.u32 %v133, 4294901760
    %v135 = vsub.f32 %v133, %v134
    %v136 = vand.u32 %v135, 4294901760
    %137 = vmatmul.f32.gmra.mxu0 %v136
    %v138 = vpop.f32.mrf.mxu0
    %v139 = vadd.f32 %v35, %v138
    %140 = vdwg.mxu0
    %v141 = vand.u32 %v90, 4294901760
    %v142 = vsub.f32 %v90, %v141
    %v143 = vand.u32 %v142, 4294901760
    %v144 = vsub.f32 %v142, %v143
    %v145 = vand.u32 %v144, 4294901760
    %146 = vmatpush.xpose.msra.mxu0 %v145
    %v147 = vand.u32 %v87, 4294901760
    %v148 = vsub.f32 %v87, %v147
    %v149 = vand.u32 %v148, 4294901760
    %v150 = vsub.f32 %v148, %v149
    %v151 = vand.u32 %v150, 4294901760
    %152 = vmatpush.xpose.msra.mxu0 %v151
    %v153 = vand.u32 %v84, 4294901760
    %v154 = vsub.f32 %v84, %v153
    %v155 = vand.u32 %v154, 4294901760
    %v156 = vsub.f32 %v154, %v155
    %v157 = vand.u32 %v156, 4294901760
    %158 = vmatpush.xpose.msra.mxu0 %v157
    %v159 = vand.u32 %v81, 4294901760
    %v160 = vsub.f32 %v81, %v159
    %v161 = vand.u32 %v160, 4294901760
    %v162 = vsub.f32 %v160, %v161
    %v163 = vand.u32 %v162, 4294901760
    %164 = vmatpush.xpose.msra.mxu0 %v163
    %v165 = vand.u32 %v78, 4294901760
    %v166 = vsub.f32 %v78, %v165
    %v167 = vand.u32 %v166, 4294901760
    %v168 = vsub.f32 %v166, %v167
    %v169 = vand.u32 %v168, 4294901760
    %170 = vmatpush.xpose.msra.mxu0 %v169
    %v171 = vand.u32 %v75, 4294901760
    %v172 = vsub.f32 %v75, %v171
    %v173 = vand.u32 %v172, 4294901760
    %v174 = vsub.f32 %v172, %v173
    %v175 = vand.u32 %v174, 4294901760
    %176 = vmatpush.xpose.msra.mxu0 %v175
    %v177 = vand.u32 %v72, 4294901760
    %v178 = vsub.f32 %v72, %v177
    %v179 = vand.u32 %v178, 4294901760
    %v180 = vsub.f32 %v178, %v179
    %v181 = vand.u32 %v180, 4294901760
    %182 = vmatpush.xpose.msra.mxu0 %v181
    %v183 = vand.u32 %v69, 4294901760
    %v184 = vsub.f32 %v69, %v183
    %v185 = vand.u32 %v184, 4294901760
    %v186 = vsub.f32 %v184, %v185
    %v187 = vand.u32 %v186, 4294901760
    %188 = vmatpush.xpose.msra.mxu0 %v187
    %v189 = vand.u32 %v66, 4294901760
    %v190 = vsub.f32 %v66, %v189
    %v191 = vand.u32 %v190, 4294901760
    %v192 = vsub.f32 %v190, %v191
    %v193 = vand.u32 %v192, 4294901760
    %194 = vmatpush.xpose.msra.mxu0 %v193
    %v195 = vand.u32 %v63, 4294901760
    %v196 = vsub.f32 %v63, %v195
    %v197 = vand.u32 %v196, 4294901760
    %v198 = vsub.f32 %v196, %v197
    %v199 = vand.u32 %v198, 4294901760
    %200 = vmatpush.xpose.msra.mxu0 %v199
    %v201 = vand.u32 %v60, 4294901760
    %v202 = vsub.f32 %v60, %v201
    %v203 = vand.u32 %v202, 4294901760
    %v204 = vsub.f32 %v202, %v203
    %v205 = vand.u32 %v204, 4294901760
    %206 = vmatpush.xpose.msra.mxu0 %v205
    %v207 = vand.u32 %v57, 4294901760
    %v208 = vsub.f32 %v57, %v207
    %v209 = vand.u32 %v208, 4294901760
    %v210 = vsub.f32 %v208, %v209
    %v211 = vand.u32 %v210, 4294901760
    %212 = vmatpush.xpose.msra.mxu0 %v211
    %v213 = vand.u32 %v54, 4294901760
    %v214 = vsub.f32 %v54, %v213
    %v215 = vand.u32 %v214, 4294901760
    %v216 = vsub.f32 %v214, %v215
    %v217 = vand.u32 %v216, 4294901760
    %218 = vmatpush.xpose.msra.mxu0 %v217
    %v219 = vand.u32 %v51, 4294901760
    %v220 = vsub.f32 %v51, %v219
    %v221 = vand.u32 %v220, 4294901760
    %v222 = vsub.f32 %v220, %v221
    %v223 = vand.u32 %v222, 4294901760
    %224 = vmatpush.xpose.msra.mxu0 %v223
    %v225 = vand.u32 %v48, 4294901760
    %v226 = vsub.f32 %v48, %v225
    %v227 = vand.u32 %v226, 4294901760
    %v228 = vsub.f32 %v226, %v227
    %v229 = vand.u32 %v228, 4294901760
    %230 = vmatpush.xpose.msra.mxu0 %v229
    %v231 = vand.u32 %v45, 4294901760
    %v232 = vsub.f32 %v45, %v231
    %v233 = vand.u32 %v232, 4294901760
    %v234 = vsub.f32 %v232, %v233
    %v235 = vand.u32 %v234, 4294901760
    %236 = vmatpush.xpose.msra.mxu0 %v235
    %v237 = vand.u32 %v39, 4294901760
    %238 = vmatmul.f32.gmra.mxu0 %v237
    %v239 = vpop.f32.mrf.mxu0
    %v240 = vadd.f32 %v131, %v239
    %v241 = vand.u32 %v42, 4294901760
    %242 = vmatmul.f32.gmra.mxu0 %v241
    %v243 = vpop.f32.mrf.mxu0
    %v244 = vadd.f32 %v139, %v243
    %245 = vdwg.mxu0
    %v246 = vand.u32 %v90, 4294901760
    %v247 = vsub.f32 %v90, %v246
    %248 = vmatpush.xpose.msra.mxu0 %v247
    %v249 = vand.u32 %v87, 4294901760
    %v250 = vsub.f32 %v87, %v249
    %251 = vmatpush.xpose.msra.mxu0 %v250
    %v252 = vand.u32 %v84, 4294901760
    %v253 = vsub.f32 %v84, %v252
    %254 = vmatpush.xpose.msra.mxu0 %v253
    %v255 = vand.u32 %v81, 4294901760
    %v256 = vsub.f32 %v81, %v255
    %257 = vmatpush.xpose.msra.mxu0 %v256
    %v258 = vand.u32 %v78, 4294901760
    %v259 = vsub.f32 %v78, %v258
    %260 = vmatpush.xpose.msra.mxu0 %v259
    %v261 = vand.u32 %v75, 4294901760
    %v262 = vsub.f32 %v75, %v261
    %263 = vmatpush.xpose.msra.mxu0 %v262
    %v264 = vand.u32 %v72, 4294901760
    %v265 = vsub.f32 %v72, %v264
    %266 = vmatpush.xpose.msra.mxu0 %v265
    %v267 = vand.u32 %v69, 4294901760
    %v268 = vsub.f32 %v69, %v267
    %269 = vmatpush.xpose.msra.mxu0 %v268
    %v270 = vand.u32 %v66, 4294901760
    %v271 = vsub.f32 %v66, %v270
    %272 = vmatpush.xpose.msra.mxu0 %v271
    %v273 = vand.u32 %v63, 4294901760
    %v274 = vsub.f32 %v63, %v273
    %275 = vmatpush.xpose.msra.mxu0 %v274
    %v276 = vand.u32 %v60, 4294901760
    %v277 = vsub.f32 %v60, %v276
    %278 = vmatpush.xpose.msra.mxu0 %v277
    %v279 = vand.u32 %v57, 4294901760
    %v280 = vsub.f32 %v57, %v279
    %281 = vmatpush.xpose.msra.mxu0 %v280
    %v282 = vand.u32 %v54, 4294901760
    %v283 = vsub.f32 %v54, %v282
    %284 = vmatpush.xpose.msra.mxu0 %v283
    %v285 = vand.u32 %v51, 4294901760
    %v286 = vsub.f32 %v51, %v285
    %287 = vmatpush.xpose.msra.mxu0 %v286
    %v288 = vand.u32 %v48, 4294901760
    %v289 = vsub.f32 %v48, %v288
    %290 = vmatpush.xpose.msra.mxu0 %v289
    %v291 = vand.u32 %v45, 4294901760
    %v292 = vsub.f32 %v45, %v291
    %293 = vmatpush.xpose.msra.mxu0 %v292
    %v294 = vand.u32 %v39, 4294901760
    %v295 = vsub.f32 %v39, %v294
    %296 = vmatmul.f32.gmra.mxu0 %v295
    %v297 = vpop.f32.mrf.mxu0
    %v298 = vadd.f32 %v240, %v297
    %v299 = vand.u32 %v42, 4294901760
    %v300 = vsub.f32 %v42, %v299
    %301 = vmatmul.f32.gmra.mxu0 %v300
    %v302 = vpop.f32.mrf.mxu0
    %v303 = vadd.f32 %v244, %v302
    %304 = vdwg.mxu0
    %v305 = vand.u32 %v90, 4294901760
    %306 = vmatpush.xpose.msra.mxu0 %v305
    %v307 = vand.u32 %v87, 4294901760
    %308 = vmatpush.xpose.msra.mxu0 %v307
    %v309 = vand.u32 %v84, 4294901760
    %310 = vmatpush.xpose.msra.mxu0 %v309
    %v311 = vand.u32 %v81, 4294901760
    %312 = vmatpush.xpose.msra.mxu0 %v311
    %v313 = vand.u32 %v78, 4294901760
    %314 = vmatpush.xpose.msra.mxu0 %v313
    %v315 = vand.u32 %v75, 4294901760
    %316 = vmatpush.xpose.msra.mxu0 %v315
    %v317 = vand.u32 %v72, 4294901760
    %318 = vmatpush.xpose.msra.mxu0 %v317
    %v319 = vand.u32 %v69, 4294901760
    %320 = vmatpush.xpose.msra.mxu0 %v319
    %v321 = vand.u32 %v66, 4294901760
    %322 = vmatpush.xpose.msra.mxu0 %v321
    %v323 = vand.u32 %v63, 4294901760
    %324 = vmatpush.xpose.msra.mxu0 %v323
    %v325 = vand.u32 %v60, 4294901760
    %326 = vmatpush.xpose.msra.mxu0 %v325
    %v327 = vand.u32 %v57, 4294901760
    %328 = vmatpush.xpose.msra.mxu0 %v327
    %v329 = vand.u32 %v54, 4294901760
    %330 = vmatpush.xpose.msra.mxu0 %v329
    %v331 = vand.u32 %v51, 4294901760
    %332 = vmatpush.xpose.msra.mxu0 %v331
    %v333 = vand.u32 %v48, 4294901760
    %334 = vmatpush.xpose.msra.mxu0 %v333
    %v335 = vand.u32 %v45, 4294901760
    %336 = vmatpush.xpose.msra.mxu0 %v335
    %v337 = vand.u32 %v39, 4294901760
    %v338 = vsub.f32 %v39, %v337
    %v339 = vand.u32 %v338, 4294901760
    %340 = vmatmul.f32.gmra.mxu0 %v339
    %v341 = vpop.f32.mrf.mxu0
    %v342 = vadd.f32 %v298, %v341
    %v343 = vand.u32 %v42, 4294901760
    %v344 = vsub.f32 %v42, %v343
    %v345 = vand.u32 %v344, 4294901760
    %346 = vmatmul.f32.gmra.mxu0 %v345
    %v347 = vpop.f32.mrf.mxu0
    %v348 = vadd.f32 %v303, %v347
    %349 = vdwg.mxu0
    %v350 = vand.u32 %v90, 4294901760
    %v351 = vsub.f32 %v90, %v350
    %v352 = vand.u32 %v351, 4294901760
    %353 = vmatpush.xpose.msra.mxu0 %v352
    %v354 = vand.u32 %v87, 4294901760
    %v355 = vsub.f32 %v87, %v354
    %v356 = vand.u32 %v355, 4294901760
    %357 = vmatpush.xpose.msra.mxu0 %v356
    %v358 = vand.u32 %v84, 4294901760
    %v359 = vsub.f32 %v84, %v358
    %v360 = vand.u32 %v359, 4294901760
    %361 = vmatpush.xpose.msra.mxu0 %v360
    %v362 = vand.u32 %v81, 4294901760
    %v363 = vsub.f32 %v81, %v362
    %v364 = vand.u32 %v363, 4294901760
    %365 = vmatpush.xpose.msra.mxu0 %v364
    %v366 = vand.u32 %v78, 4294901760
    %v367 = vsub.f32 %v78, %v366
    %v368 = vand.u32 %v367, 4294901760
    %369 = vmatpush.xpose.msra.mxu0 %v368
    %v370 = vand.u32 %v75, 4294901760
    %v371 = vsub.f32 %v75, %v370
    %v372 = vand.u32 %v371, 4294901760
    %373 = vmatpush.xpose.msra.mxu0 %v372
    %v374 = vand.u32 %v72, 4294901760
    %v375 = vsub.f32 %v72, %v374
    %v376 = vand.u32 %v375, 4294901760
    %377 = vmatpush.xpose.msra.mxu0 %v376
    %v378 = vand.u32 %v69, 4294901760
    %v379 = vsub.f32 %v69, %v378
    %v380 = vand.u32 %v379, 4294901760
    %381 = vmatpush.xpose.msra.mxu0 %v380
    %v382 = vand.u32 %v66, 4294901760
    %v383 = vsub.f32 %v66, %v382
    %v384 = vand.u32 %v383, 4294901760
    %385 = vmatpush.xpose.msra.mxu0 %v384
    %v386 = vand.u32 %v63, 4294901760
    %v387 = vsub.f32 %v63, %v386
    %v388 = vand.u32 %v387, 4294901760
    %389 = vmatpush.xpose.msra.mxu0 %v388
    %v390 = vand.u32 %v60, 4294901760
    %v391 = vsub.f32 %v60, %v390
    %v392 = vand.u32 %v391, 4294901760
    %393 = vmatpush.xpose.msra.mxu0 %v392
    %v394 = vand.u32 %v57, 4294901760
    %v395 = vsub.f32 %v57, %v394
    %v396 = vand.u32 %v395, 4294901760
    %397 = vmatpush.xpose.msra.mxu0 %v396
    %v398 = vand.u32 %v54, 4294901760
    %v399 = vsub.f32 %v54, %v398
    %v400 = vand.u32 %v399, 4294901760
    %401 = vmatpush.xpose.msra.mxu0 %v400
    %v402 = vand.u32 %v51, 4294901760
    %v403 = vsub.f32 %v51, %v402
    %v404 = vand.u32 %v403, 4294901760
    %405 = vmatpush.xpose.msra.mxu0 %v404
    %v406 = vand.u32 %v48, 4294901760
    %v407 = vsub.f32 %v48, %v406
    %v408 = vand.u32 %v407, 4294901760
    %409 = vmatpush.xpose.msra.mxu0 %v408
    %v410 = vand.u32 %v45, 4294901760
    %v411 = vsub.f32 %v45, %v410
    %v412 = vand.u32 %v411, 4294901760
    %413 = vmatpush.xpose.msra.mxu0 %v412
    %v414 = vand.u32 %v39, 4294901760
    %415 = vmatmul.f32.gmra.mxu0 %v414
    %v416 = vpop.f32.mrf.mxu0
    %v417 = vadd.f32 %v342, %v416
    %v418 = vand.u32 %v42, 4294901760
    %419 = vmatmul.f32.gmra.mxu0 %v418
    %v420 = vpop.f32.mrf.mxu0
    %v421 = vadd.f32 %v348, %v420
    %422 = vdwg.mxu0
    %v423 = vand.u32 %v90, 4294901760
    %424 = vmatpush.xpose.msra.mxu0 %v423
    %v425 = vand.u32 %v87, 4294901760
    %426 = vmatpush.xpose.msra.mxu0 %v425
    %v427 = vand.u32 %v84, 4294901760
    %428 = vmatpush.xpose.msra.mxu0 %v427
    %v429 = vand.u32 %v81, 4294901760
    %430 = vmatpush.xpose.msra.mxu0 %v429
    %v431 = vand.u32 %v78, 4294901760
    %432 = vmatpush.xpose.msra.mxu0 %v431
    %v433 = vand.u32 %v75, 4294901760
    %434 = vmatpush.xpose.msra.mxu0 %v433
    %v435 = vand.u32 %v72, 4294901760
    %436 = vmatpush.xpose.msra.mxu0 %v435
    %v437 = vand.u32 %v69, 4294901760
    %438 = vmatpush.xpose.msra.mxu0 %v437
    %v439 = vand.u32 %v66, 4294901760
    %440 = vmatpush.xpose.msra.mxu0 %v439
    %v441 = vand.u32 %v63, 4294901760
    %442 = vmatpush.xpose.msra.mxu0 %v441
    %v443 = vand.u32 %v60, 4294901760
    %444 = vmatpush.xpose.msra.mxu0 %v443
    %v445 = vand.u32 %v57, 4294901760
    %446 = vmatpush.xpose.msra.mxu0 %v445
    %v447 = vand.u32 %v54, 4294901760
    %448 = vmatpush.xpose.msra.mxu0 %v447
    %v449 = vand.u32 %v51, 4294901760
    %450 = vmatpush.xpose.msra.mxu0 %v449
    %v451 = vand.u32 %v48, 4294901760
    %452 = vmatpush.xpose.msra.mxu0 %v451
    %v453 = vand.u32 %v45, 4294901760
    %454 = vmatpush.xpose.msra.mxu0 %v453
    %v455 = vand.u32 %v39, 4294901760
    %456 = vmatmul.f32.gmra.mxu0 %v455
    %v457 = vpop.f32.mrf.mxu0
    %v458 = vadd.f32 %v417, %v457
    %v459 = vand.u32 %v42, 4294901760
    %460 = vmatmul.f32.gmra.mxu0 %v459
    %v461 = vpop.f32.mrf.mxu0
    %v462 = vadd.f32 %v421, %v461
    %463 = vdwg.mxu0
    %v464 = vmul.f32 %v458, 5.656854
    %v465 = vmul.f32 %v462, 5.656854
    %466 = vst [vmem:[#allocation2] sm:$0xff] %v464
    %467 = vst [vmem:[#allocation2 + $0x8] sm:$0xff] %v465
    // Predicated region
    $region14: #{tpu_custom_call.1} parent=1 // pred_check
      _
    $region15: #{tpu_custom_call.1} parent=1 // pred_check_branch
      %469 = sbr.rel (0) target = $region17
    $region16: #{tpu_custom_call.1} parent=1 // pred_region
      %471 = vsyncadd [#allocation3], 0
      %s472 = sshll.u32 [#allocation2], 4
      %s473 = int_to_ptr.vmem [resolvable:$true] %s472
      %s474 = sshll.u32 %s3, 4
      %s475 = int_to_ptr.hbm [resolvable:$true] %s474
      %480 = dma.vmem_to_hbm [thread:$0]  %s473, 256, %s475, [#allocation3], 128, 128, 8
    $region17: #{tpu_custom_call.1} parent=1 // pred_fallthru
      _
    // Predicated region
    $region18: #{tpu_custom_call.1} parent=1 // pred_check
      _
    $region19: #{tpu_custom_call.1} parent=1 // pred_check_branch
      %482 = sbr.rel (0) target = $region21
    $region20: #{tpu_custom_call.1} parent=1 // pred_region
      %484 = dma.done [#allocation3], 256
    $region21: #{tpu_custom_call.1} parent=1 // pred_fallthru
      _
    %485 = vsyncpa [#allocation3], 1

// kernel: tpu_custom_call.1
$region0: #{tpu_custom_call.1}
  #allocation0 [shape = 'u32[]', space=smem, size = 0x4, offset = 0x4, fixed_abs, tag = 'smem constant byte address 0x4 - core index']
  #allocation1 [shape = 'u32[72,128]{1,0:T(1,128)}', space=vmem, size = 0x9000, scoped, tag = 'internal scratch']
  %s0 = inlined_call_operand.vmem [shape: f32[16,16], index: 0, kind: input, shape index: {}]
  %s1 = inlined_call_operand.vmem [shape: f32[128,16], index: 1, kind: input, shape index: {}]
  %s2 = inlined_call_operand.vmem [shape: f32[1,128], index: 2, kind: input, shape index: {}]
  %s3 = inlined_call_operand.hbm [shape: f32[16,128], index: 3, kind: output, shape index: {}]
  %s4 = sld [smem:[#allocation0]]
  $region22: #{tpu_custom_call.1} parent=0
    _
  %s6 = ssub.s32 1, %s4
  %s7 = scalar_select 0, %s6, %s4
  $region1: #{tpu_custom_call.1} parent=0
    #allocation2 [shape = 'u8[8192]{0}', space=vmem, size = 0x2000, scoped, tag = 'output window, operand 0, single buffered']
    #allocation3 [shape = 's32[1]{0}', space=sflag, size = 0x4, scoped, tag = 'scoped memory for tpu_custom_call.1']
    %8 = vsyncpa [#allocation3], 0
    // Predicated region
    $region2: #{tpu_custom_call.1} parent=1 // pred_check
      _
    $region3: #{tpu_custom_call.1} parent=1 // pred_check_branch
      %10 = sbr.rel (0) target = $region5
    $region4: #{tpu_custom_call.1} parent=1 // pred_region
      _
    $region5: #{tpu_custom_call.1} parent=1 // pred_fallthru
      _
    // Predicated region
    $region6: #{tpu_custom_call.1} parent=1 // pred_check
      _
    $region7: #{tpu_custom_call.1} parent=1 // pred_check_branch
      %12 = sbr.rel (0) target = $region9
    $region8: #{tpu_custom_call.1} parent=1 // pred_region
      _
    $region9: #{tpu_custom_call.1} parent=1 // pred_fallthru
      _
    // Predicated region
    $region10: #{tpu_custom_call.1} parent=1 // pred_check
      _
    $region11: #{tpu_custom_call.1} parent=1 // pred_check_branch
      %14 = sbr.rel (0) target = $region13
    $region12: #{tpu_custom_call.1} parent=1 // pred_region
      _
    $region13: #{tpu_custom_call.1} parent=1 // pred_fallthru
      _
    %v15 = vld [vmem:[%s0] sm:$0xff]
    %v16 = vld [vmem:[%s0 + $0x8] sm:$0xff]
    %v17 = vld [vmem:[%s1] sm:$0xff]
    %v18 = vld [vmem:[%s1 + $0x8] sm:$0xff]
    %v19 = vld [vmem:[%s1 + $0x10] sm:$0xff]
    %v20 = vld [vmem:[%s1 + $0x18] sm:$0xff]
    %v21 = vld [vmem:[%s1 + $0x20] sm:$0xff]
    %v22 = vld [vmem:[%s1 + $0x28] sm:$0xff]
    %v23 = vld [vmem:[%s1 + $0x30] sm:$0xff]
    %v24 = vld [vmem:[%s1 + $0x38] sm:$0xff]
    %v25 = vld [vmem:[%s1 + $0x40] sm:$0xff]
    %v26 = vld [vmem:[%s1 + $0x48] sm:$0xff]
    %v27 = vld [vmem:[%s1 + $0x50] sm:$0xff]
    %v28 = vld [vmem:[%s1 + $0x58] sm:$0xff]
    %v29 = vld [vmem:[%s1 + $0x60] sm:$0xff]
    %v30 = vld [vmem:[%s1 + $0x68] sm:$0xff]
    %v31 = vld [vmem:[%s1 + $0x70] sm:$0xff]
    %v32 = vld [vmem:[%s1 + $0x78] sm:$0xff]
    %v33 = vld [vmem:[%s2] sm:$0x1]
    %v35 = vperm.slane %v33, 0
    %vm37 = vcmask 130048
    %v39 = vsel %vm37, %v15, 0
    %v42 = vsel %vm37, %v16, 0
    %v45 = vsel %vm37, %v17, 0
    %v48 = vsel %vm37, %v18, 0
    %v51 = vsel %vm37, %v19, 0
    %v54 = vsel %vm37, %v20, 0
    %v57 = vsel %vm37, %v21, 0
    %v60 = vsel %vm37, %v22, 0
    %v63 = vsel %vm37, %v23, 0
    %v66 = vsel %vm37, %v24, 0
    %v69 = vsel %vm37, %v25, 0
    %v72 = vsel %vm37, %v26, 0
    %v75 = vsel %vm37, %v27, 0
    %v78 = vsel %vm37, %v28, 0
    %v81 = vsel %vm37, %v29, 0
    %v84 = vsel %vm37, %v30, 0
    %v87 = vsel %vm37, %v31, 0
    %v90 = vsel %vm37, %v32, 0
    %v92 = vand.u32 %v90, 4294901760
    %93 = vmatpush.xpose.msra.mxu0 %v92
    %v94 = vand.u32 %v87, 4294901760
    %95 = vmatpush.xpose.msra.mxu0 %v94
    %v96 = vand.u32 %v84, 4294901760
    %97 = vmatpush.xpose.msra.mxu0 %v96
    %v98 = vand.u32 %v81, 4294901760
    %99 = vmatpush.xpose.msra.mxu0 %v98
    %v100 = vand.u32 %v78, 4294901760
    %101 = vmatpush.xpose.msra.mxu0 %v100
    %v102 = vand.u32 %v75, 4294901760
    %103 = vmatpush.xpose.msra.mxu0 %v102
    %v104 = vand.u32 %v72, 4294901760
    %105 = vmatpush.xpose.msra.mxu0 %v104
    %v106 = vand.u32 %v69, 4294901760
    %107 = vmatpush.xpose.msra.mxu0 %v106
    %v108 = vand.u32 %v66, 4294901760
    %109 = vmatpush.xpose.msra.mxu0 %v108
    %v110 = vand.u32 %v63, 4294901760
    %111 = vmatpush.xpose.msra.mxu0 %v110
    %v112 = vand.u32 %v60, 4294901760
    %113 = vmatpush.xpose.msra.mxu0 %v112
    %v114 = vand.u32 %v57, 4294901760
    %115 = vmatpush.xpose.msra.mxu0 %v114
    %v116 = vand.u32 %v54, 4294901760
    %117 = vmatpush.xpose.msra.mxu0 %v116
    %v118 = vand.u32 %v51, 4294901760
    %119 = vmatpush.xpose.msra.mxu0 %v118
    %v120 = vand.u32 %v48, 4294901760
    %121 = vmatpush.xpose.msra.mxu0 %v120
    %v122 = vand.u32 %v45, 4294901760
    %123 = vmatpush.xpose.msra.mxu0 %v122
    %v124 = vand.u32 %v39, 4294901760
    %v125 = vsub.f32 %v39, %v124
    %v126 = vand.u32 %v125, 4294901760
    %v127 = vsub.f32 %v125, %v126
    %v128 = vand.u32 %v127, 4294901760
    %129 = vmatmul.f32.gmra.mxu0 %v128
    %v130 = vpop.f32.mrf.mxu0
    %v131 = vadd.f32 %v35, %v130
    %v132 = vand.u32 %v42, 4294901760
    %v133 = vsub.f32 %v42, %v132
    %v134 = vand.u32 %v133, 4294901760
    %v135 = vsub.f32 %v133, %v134
    %v136 = vand.u32 %v135, 4294901760
    %137 = vmatmul.f32.gmra.mxu0 %v136
    %v138 = vpop.f32.mrf.mxu0
    %v139 = vadd.f32 %v35, %v138
    %140 = vdwg.mxu0
    %v141 = vand.u32 %v90, 4294901760
    %v142 = vsub.f32 %v90, %v141
    %v143 = vand.u32 %v142, 4294901760
    %v144 = vsub.f32 %v142, %v143
    %v145 = vand.u32 %v144, 4294901760
    %146 = vmatpush.xpose.msra.mxu0 %v145
    %v147 = vand.u32 %v87, 4294901760
    %v148 = vsub.f32 %v87, %v147
    %v149 = vand.u32 %v148, 4294901760
    %v150 = vsub.f32 %v148, %v149
    %v151 = vand.u32 %v150, 4294901760
    %152 = vmatpush.xpose.msra.mxu0 %v151
    %v153 = vand.u32 %v84, 4294901760
    %v154 = vsub.f32 %v84, %v153
    %v155 = vand.u32 %v154, 4294901760
    %v156 = vsub.f32 %v154, %v155
    %v157 = vand.u32 %v156, 4294901760
    %158 = vmatpush.xpose.msra.mxu0 %v157
    %v159 = vand.u32 %v81, 4294901760
    %v160 = vsub.f32 %v81, %v159
    %v161 = vand.u32 %v160, 4294901760
    %v162 = vsub.f32 %v160, %v161
    %v163 = vand.u32 %v162, 4294901760
    %164 = vmatpush.xpose.msra.mxu0 %v163
    %v165 = vand.u32 %v78, 4294901760
    %v166 = vsub.f32 %v78, %v165
    %v167 = vand.u32 %v166, 4294901760
    %v168 = vsub.f32 %v166, %v167
    %v169 = vand.u32 %v168, 4294901760
    %170 = vmatpush.xpose.msra.mxu0 %v169
    %v171 = vand.u32 %v75, 4294901760
    %v172 = vsub.f32 %v75, %v171
    %v173 = vand.u32 %v172, 4294901760
    %v174 = vsub.f32 %v172, %v173
    %v175 = vand.u32 %v174, 4294901760
    %176 = vmatpush.xpose.msra.mxu0 %v175
    %v177 = vand.u32 %v72, 4294901760
    %v178 = vsub.f32 %v72, %v177
    %v179 = vand.u32 %v178, 4294901760
    %v180 = vsub.f32 %v178, %v179
    %v181 = vand.u32 %v180, 4294901760
    %182 = vmatpush.xpose.msra.mxu0 %v181
    %v183 = vand.u32 %v69, 4294901760
    %v184 = vsub.f32 %v69, %v183
    %v185 = vand.u32 %v184, 4294901760
    %v186 = vsub.f32 %v184, %v185
    %v187 = vand.u32 %v186, 4294901760
    %188 = vmatpush.xpose.msra.mxu0 %v187
    %v189 = vand.u32 %v66, 4294901760
    %v190 = vsub.f32 %v66, %v189
    %v191 = vand.u32 %v190, 4294901760
    %v192 = vsub.f32 %v190, %v191
    %v193 = vand.u32 %v192, 4294901760
    %194 = vmatpush.xpose.msra.mxu0 %v193
    %v195 = vand.u32 %v63, 4294901760
    %v196 = vsub.f32 %v63, %v195
    %v197 = vand.u32 %v196, 4294901760
    %v198 = vsub.f32 %v196, %v197
    %v199 = vand.u32 %v198, 4294901760
    %200 = vmatpush.xpose.msra.mxu0 %v199
    %v201 = vand.u32 %v60, 4294901760
    %v202 = vsub.f32 %v60, %v201
    %v203 = vand.u32 %v202, 4294901760
    %v204 = vsub.f32 %v202, %v203
    %v205 = vand.u32 %v204, 4294901760
    %206 = vmatpush.xpose.msra.mxu0 %v205
    %v207 = vand.u32 %v57, 4294901760
    %v208 = vsub.f32 %v57, %v207
    %v209 = vand.u32 %v208, 4294901760
    %v210 = vsub.f32 %v208, %v209
    %v211 = vand.u32 %v210, 4294901760
    %212 = vmatpush.xpose.msra.mxu0 %v211
    %v213 = vand.u32 %v54, 4294901760
    %v214 = vsub.f32 %v54, %v213
    %v215 = vand.u32 %v214, 4294901760
    %v216 = vsub.f32 %v214, %v215
    %v217 = vand.u32 %v216, 4294901760
    %218 = vmatpush.xpose.msra.mxu0 %v217
    %v219 = vand.u32 %v51, 4294901760
    %v220 = vsub.f32 %v51, %v219
    %v221 = vand.u32 %v220, 4294901760
    %v222 = vsub.f32 %v220, %v221
    %v223 = vand.u32 %v222, 4294901760
    %224 = vmatpush.xpose.msra.mxu0 %v223
    %v225 = vand.u32 %v48, 4294901760
    %v226 = vsub.f32 %v48, %v225
    %v227 = vand.u32 %v226, 4294901760
    %v228 = vsub.f32 %v226, %v227
    %v229 = vand.u32 %v228, 4294901760
    %230 = vmatpush.xpose.msra.mxu0 %v229
    %v231 = vand.u32 %v45, 4294901760
    %v232 = vsub.f32 %v45, %v231
    %v233 = vand.u32 %v232, 4294901760
    %v234 = vsub.f32 %v232, %v233
    %v235 = vand.u32 %v234, 4294901760
    %236 = vmatpush.xpose.msra.mxu0 %v235
    %v237 = vand.u32 %v39, 4294901760
    %238 = vmatmul.f32.gmra.mxu0 %v237
    %v239 = vpop.f32.mrf.mxu0
    %v240 = vadd.f32 %v131, %v239
    %v241 = vand.u32 %v42, 4294901760
    %242 = vmatmul.f32.gmra.mxu0 %v241
    %v243 = vpop.f32.mrf.mxu0
    %v244 = vadd.f32 %v139, %v243
    %245 = vdwg.mxu0
    %v246 = vand.u32 %v90, 4294901760
    %v247 = vsub.f32 %v90, %v246
    %248 = vmatpush.xpose.msra.mxu0 %v247
    %v249 = vand.u32 %v87, 4294901760
    %v250 = vsub.f32 %v87, %v249
    %251 = vmatpush.xpose.msra.mxu0 %v250
    %v252 = vand.u32 %v84, 4294901760
    %v253 = vsub.f32 %v84, %v252
    %254 = vmatpush.xpose.msra.mxu0 %v253
    %v255 = vand.u32 %v81, 4294901760
    %v256 = vsub.f32 %v81, %v255
    %257 = vmatpush.xpose.msra.mxu0 %v256
    %v258 = vand.u32 %v78, 4294901760
    %v259 = vsub.f32 %v78, %v258
    %260 = vmatpush.xpose.msra.mxu0 %v259
    %v261 = vand.u32 %v75, 4294901760
    %v262 = vsub.f32 %v75, %v261
    %263 = vmatpush.xpose.msra.mxu0 %v262
    %v264 = vand.u32 %v72, 4294901760
    %v265 = vsub.f32 %v72, %v264
    %266 = vmatpush.xpose.msra.mxu0 %v265
    %v267 = vand.u32 %v69, 4294901760
    %v268 = vsub.f32 %v69, %v267
    %269 = vmatpush.xpose.msra.mxu0 %v268
    %v270 = vand.u32 %v66, 4294901760
    %v271 = vsub.f32 %v66, %v270
    %272 = vmatpush.xpose.msra.mxu0 %v271
    %v273 = vand.u32 %v63, 4294901760
    %v274 = vsub.f32 %v63, %v273
    %275 = vmatpush.xpose.msra.mxu0 %v274
    %v276 = vand.u32 %v60, 4294901760
    %v277 = vsub.f32 %v60, %v276
    %278 = vmatpush.xpose.msra.mxu0 %v277
    %v279 = vand.u32 %v57, 4294901760
    %v280 = vsub.f32 %v57, %v279
    %281 = vmatpush.xpose.msra.mxu0 %v280
    %v282 = vand.u32 %v54, 4294901760
    %v283 = vsub.f32 %v54, %v282
    %284 = vmatpush.xpose.msra.mxu0 %v283
    %v285 = vand.u32 %v51, 4294901760
    %v286 = vsub.f32 %v51, %v285
    %287 = vmatpush.xpose.msra.mxu0 %v286
    %v288 = vand.u32 %v48, 4294901760
    %v289 = vsub.f32 %v48, %v288
    %290 = vmatpush.xpose.msra.mxu0 %v289
    %v291 = vand.u32 %v45, 4294901760
    %v292 = vsub.f32 %v45, %v291
    %293 = vmatpush.xpose.msra.mxu0 %v292
    %v294 = vand.u32 %v39, 4294901760
    %v295 = vsub.f32 %v39, %v294
    %296 = vmatmul.f32.gmra.mxu0 %v295
    %v297 = vpop.f32.mrf.mxu0
    %v298 = vadd.f32 %v240, %v297
    %v299 = vand.u32 %v42, 4294901760
    %v300 = vsub.f32 %v42, %v299
    %301 = vmatmul.f32.gmra.mxu0 %v300
    %v302 = vpop.f32.mrf.mxu0
    %v303 = vadd.f32 %v244, %v302
    %304 = vdwg.mxu0
    %v305 = vand.u32 %v90, 4294901760
    %306 = vmatpush.xpose.msra.mxu0 %v305
    %v307 = vand.u32 %v87, 4294901760
    %308 = vmatpush.xpose.msra.mxu0 %v307
    %v309 = vand.u32 %v84, 4294901760
    %310 = vmatpush.xpose.msra.mxu0 %v309
    %v311 = vand.u32 %v81, 4294901760
    %312 = vmatpush.xpose.msra.mxu0 %v311
    %v313 = vand.u32 %v78, 4294901760
    %314 = vmatpush.xpose.msra.mxu0 %v313
    %v315 = vand.u32 %v75, 4294901760
    %316 = vmatpush.xpose.msra.mxu0 %v315
    %v317 = vand.u32 %v72, 4294901760
    %318 = vmatpush.xpose.msra.mxu0 %v317
    %v319 = vand.u32 %v69, 4294901760
    %320 = vmatpush.xpose.msra.mxu0 %v319
    %v321 = vand.u32 %v66, 4294901760
    %322 = vmatpush.xpose.msra.mxu0 %v321
    %v323 = vand.u32 %v63, 4294901760
    %324 = vmatpush.xpose.msra.mxu0 %v323
    %v325 = vand.u32 %v60, 4294901760
    %326 = vmatpush.xpose.msra.mxu0 %v325
    %v327 = vand.u32 %v57, 4294901760
    %328 = vmatpush.xpose.msra.mxu0 %v327
    %v329 = vand.u32 %v54, 4294901760
    %330 = vmatpush.xpose.msra.mxu0 %v329
    %v331 = vand.u32 %v51, 4294901760
    %332 = vmatpush.xpose.msra.mxu0 %v331
    %v333 = vand.u32 %v48, 4294901760
    %334 = vmatpush.xpose.msra.mxu0 %v333
    %v335 = vand.u32 %v45, 4294901760
    %336 = vmatpush.xpose.msra.mxu0 %v335
    %v337 = vand.u32 %v39, 4294901760
    %v338 = vsub.f32 %v39, %v337
    %v339 = vand.u32 %v338, 4294901760
    %340 = vmatmul.f32.gmra.mxu0 %v339
    %v341 = vpop.f32.mrf.mxu0
    %v342 = vadd.f32 %v298, %v341
    %v343 = vand.u32 %v42, 4294901760
    %v344 = vsub.f32 %v42, %v343
    %v345 = vand.u32 %v344, 4294901760
    %346 = vmatmul.f32.gmra.mxu0 %v345
    %v347 = vpop.f32.mrf.mxu0
    %v348 = vadd.f32 %v303, %v347
    %349 = vdwg.mxu0
    %v350 = vand.u32 %v90, 4294901760
    %v351 = vsub.f32 %v90, %v350
    %v352 = vand.u32 %v351, 4294901760
    %353 = vmatpush.xpose.msra.mxu0 %v352
    %v354 = vand.u32 %v87, 4294901760
    %v355 = vsub.f32 %v87, %v354
    %v356 = vand.u32 %v355, 4294901760
    %357 = vmatpush.xpose.msra.mxu0 %v356
    %v358 = vand.u32 %v84, 4294901760
    %v359 = vsub.f32 %v84, %v358
    %v360 = vand.u32 %v359, 4294901760
    %361 = vmatpush.xpose.msra.mxu0 %v360
    %v362 = vand.u32 %v81, 4294901760
    %v363 = vsub.f32 %v81, %v362
    %v364 = vand.u32 %v363, 4294901760
    %365 = vmatpush.xpose.msra.mxu0 %v364
    %v366 = vand.u32 %v78, 4294901760
    %v367 = vsub.f32 %v78, %v366
    %v368 = vand.u32 %v367, 4294901760
    %369 = vmatpush.xpose.msra.mxu0 %v368
    %v370 = vand.u32 %v75, 4294901760
    %v371 = vsub.f32 %v75, %v370
    %v372 = vand.u32 %v371, 4294901760
    %373 = vmatpush.xpose.msra.mxu0 %v372
    %v374 = vand.u32 %v72, 4294901760
    %v375 = vsub.f32 %v72, %v374
    %v376 = vand.u32 %v375, 4294901760
    %377 = vmatpush.xpose.msra.mxu0 %v376
    %v378 = vand.u32 %v69, 4294901760
    %v379 = vsub.f32 %v69, %v378
    %v380 = vand.u32 %v379, 4294901760
    %381 = vmatpush.xpose.msra.mxu0 %v380
    %v382 = vand.u32 %v66, 4294901760
    %v383 = vsub.f32 %v66, %v382
    %v384 = vand.u32 %v383, 4294901760
    %385 = vmatpush.xpose.msra.mxu0 %v384
    %v386 = vand.u32 %v63, 4294901760
    %v387 = vsub.f32 %v63, %v386
    %v388 = vand.u32 %v387, 4294901760
    %389 = vmatpush.xpose.msra.mxu0 %v388
    %v390 = vand.u32 %v60, 4294901760
    %v391 = vsub.f32 %v60, %v390
    %v392 = vand.u32 %v391, 4294901760
    %393 = vmatpush.xpose.msra.mxu0 %v392
    %v394 = vand.u32 %v57, 4294901760
    %v395 = vsub.f32 %v57, %v394
    %v396 = vand.u32 %v395, 4294901760
    %397 = vmatpush.xpose.msra.mxu0 %v396
    %v398 = vand.u32 %v54, 4294901760
    %v399 = vsub.f32 %v54, %v398
    %v400 = vand.u32 %v399, 4294901760
    %401 = vmatpush.xpose.msra.mxu0 %v400
    %v402 = vand.u32 %v51, 4294901760
    %v403 = vsub.f32 %v51, %v402
    %v404 = vand.u32 %v403, 4294901760
    %405 = vmatpush.xpose.msra.mxu0 %v404
    %v406 = vand.u32 %v48, 4294901760
    %v407 = vsub.f32 %v48, %v406
    %v408 = vand.u32 %v407, 4294901760
    %409 = vmatpush.xpose.msra.mxu0 %v408
    %v410 = vand.u32 %v45, 4294901760
    %v411 = vsub.f32 %v45, %v410
    %v412 = vand.u32 %v411, 4294901760
    %413 = vmatpush.xpose.msra.mxu0 %v412
    %v414 = vand.u32 %v39, 4294901760
    %415 = vmatmul.f32.gmra.mxu0 %v414
    %v416 = vpop.f32.mrf.mxu0
    %v417 = vadd.f32 %v342, %v416
    %v418 = vand.u32 %v42, 4294901760
    %419 = vmatmul.f32.gmra.mxu0 %v418
    %v420 = vpop.f32.mrf.mxu0
    %v421 = vadd.f32 %v348, %v420
    %422 = vdwg.mxu0
    %v423 = vand.u32 %v90, 4294901760
    %424 = vmatpush.xpose.msra.mxu0 %v423
    %v425 = vand.u32 %v87, 4294901760
    %426 = vmatpush.xpose.msra.mxu0 %v425
    %v427 = vand.u32 %v84, 4294901760
    %428 = vmatpush.xpose.msra.mxu0 %v427
    %v429 = vand.u32 %v81, 4294901760
    %430 = vmatpush.xpose.msra.mxu0 %v429
    %v431 = vand.u32 %v78, 4294901760
    %432 = vmatpush.xpose.msra.mxu0 %v431
    %v433 = vand.u32 %v75, 4294901760
    %434 = vmatpush.xpose.msra.mxu0 %v433
    %v435 = vand.u32 %v72, 4294901760
    %436 = vmatpush.xpose.msra.mxu0 %v435
    %v437 = vand.u32 %v69, 4294901760
    %438 = vmatpush.xpose.msra.mxu0 %v437
    %v439 = vand.u32 %v66, 4294901760
    %440 = vmatpush.xpose.msra.mxu0 %v439
    %v441 = vand.u32 %v63, 4294901760
    %442 = vmatpush.xpose.msra.mxu0 %v441
    %v443 = vand.u32 %v60, 4294901760
    %444 = vmatpush.xpose.msra.mxu0 %v443
    %v445 = vand.u32 %v57, 4294901760
    %446 = vmatpush.xpose.msra.mxu0 %v445
    %v447 = vand.u32 %v54, 4294901760
    %448 = vmatpush.xpose.msra.mxu0 %v447
    %v449 = vand.u32 %v51, 4294901760
    %450 = vmatpush.xpose.msra.mxu0 %v449
    %v451 = vand.u32 %v48, 4294901760
    %452 = vmatpush.xpose.msra.mxu0 %v451
    %v453 = vand.u32 %v45, 4294901760
    %454 = vmatpush.xpose.msra.mxu0 %v453
    %v455 = vand.u32 %v39, 4294901760
    %456 = vmatmul.f32.gmra.mxu0 %v455
    %v457 = vpop.f32.mrf.mxu0
    %v458 = vadd.f32 %v417, %v457
    %v459 = vand.u32 %v42, 4294901760
    %460 = vmatmul.f32.gmra.mxu0 %v459
    %v461 = vpop.f32.mrf.mxu0
    %v462 = vadd.f32 %v421, %v461
    %463 = vdwg.mxu0
    %v464 = vmul.f32 %v458, 5.656854
    %v465 = vmul.f32 %v462, 5.656854
    %466 = vst [vmem:[#allocation2] sm:$0xff] %v464
    %467 = vst [vmem:[#allocation2 + $0x8] sm:$0xff] %v465
    // Predicated region
    $region14: #{tpu_custom_call.1} parent=1 // pred_check
      _
    $region15: #{tpu_custom_call.1} parent=1 // pred_check_branch
      %469 = sbr.rel (0) target = $region17
    $region16: #{tpu_custom_call.1} parent=1 // pred_region
      %471 = vsyncadd [#allocation3], 0
      %s472 = sshll.u32 [#allocation2], 4
      %s473 = int_to_ptr.vmem [resolvable:$true] %s472
      %s474 = sshll.u32 %s3, 4
      %s475 = int_to_ptr.hbm [resolvable:$true] %s474
      %480 = dma.vmem_to_hbm [thread:$0]  %s473, 256, %s475, [#allocation3], 128, 128, 8
    $region17: #{tpu_custom_call.1} parent=1 // pred_fallthru
      _
    // Predicated region
    $region18: #{tpu_custom_call.1} parent=1 // pred_check
      _
    $region19: #{tpu_custom_call.1} parent=1 // pred_check_branch
      %482 = sbr.rel (0) target = $region21
    $region20: #{tpu_custom_call.1} parent=1 // pred_region
      %484 = dma.done [#allocation3], 256
    $region21: #{tpu_custom_call.1} parent=1 // pred_fallthru
      _
    %485 = vsyncpa [#allocation3], 1

// kernel: tpu_custom_call.1
$region0: #{tpu_custom_call.1}
  #allocation0 [shape = 'u32[]', space=smem, size = 0x4, offset = 0x4, fixed_abs, tag = 'smem constant byte address 0x4 - core index']
  #allocation1 [shape = 'u32[72,128]{1,0:T(1,128)}', space=vmem, size = 0x9000, scoped, tag = 'internal scratch']
  %s0 = inlined_call_operand.vmem [shape: f32[16,16], index: 0, kind: input, shape index: {}]
  %s1 = inlined_call_operand.vmem [shape: f32[128,16], index: 1, kind: input, shape index: {}]
  %s2 = inlined_call_operand.vmem [shape: f32[1,128], index: 2, kind: input, shape index: {}]
  %s3 = inlined_call_operand.hbm [shape: f32[16,128], index: 3, kind: output, shape index: {}]
  %s4 = sld [smem:[#allocation0]]
  $region22: #{tpu_custom_call.1} parent=0
    _
  %s6 = ssub.s32 1, %s4
  %s7 = scalar_select 0, %s6, %s4
  $region1: #{tpu_custom_call.1} parent=0
    #allocation2 [shape = 'u8[8192]{0}', space=vmem, size = 0x2000, scoped, tag = 'output window, operand 0, single buffered']
    #allocation3 [shape = 's32[1]{0}', space=sflag, size = 0x4, scoped, tag = 'scoped memory for tpu_custom_call.1']
    %8 = vsyncpa [#allocation3], 0
    // Predicated region
    $region2: #{tpu_custom_call.1} parent=1 // pred_check
      _
    $region3: #{tpu_custom_call.1} parent=1 // pred_check_branch
      %10 = sbr.rel (0) target = $region5
    $region4: #{tpu_custom_call.1} parent=1 // pred_region
      _
    $region5: #{tpu_custom_call.1} parent=1 // pred_fallthru
      _
    // Predicated region
    $region6: #{tpu_custom_call.1} parent=1 // pred_check
      _
    $region7: #{tpu_custom_call.1} parent=1 // pred_check_branch
      %12 = sbr.rel (0) target = $region9
    $region8: #{tpu_custom_call.1} parent=1 // pred_region
      _
    $region9: #{tpu_custom_call.1} parent=1 // pred_fallthru
      _
    // Predicated region
    $region10: #{tpu_custom_call.1} parent=1 // pred_check
      _
    $region11: #{tpu_custom_call.1} parent=1 // pred_check_branch
      %14 = sbr.rel (0) target = $region13
    $region12: #{tpu_custom_call.1} parent=1 // pred_region
      _
    $region13: #{tpu_custom_call.1} parent=1 // pred_fallthru
      _
    %v15 = vld [vmem:[%s0] sm:$0xff]
    %v16 = vld [vmem:[%s0 + $0x8] sm:$0xff]
    %v17 = vld [vmem:[%s1] sm:$0xff]
    %v18 = vld [vmem:[%s1 + $0x8] sm:$0xff]
    %v19 = vld [vmem:[%s1 + $0x10] sm:$0xff]
    %v20 = vld [vmem:[%s1 + $0x18] sm:$0xff]
    %v21 = vld [vmem:[%s1 + $0x20] sm:$0xff]
    %v22 = vld [vmem:[%s1 + $0x28] sm:$0xff]
    %v23 = vld [vmem:[%s1 + $0x30] sm:$0xff]
    %v24 = vld [vmem:[%s1 + $0x38] sm:$0xff]
    %v25 = vld [vmem:[%s1 + $0x40] sm:$0xff]
    %v26 = vld [vmem:[%s1 + $0x48] sm:$0xff]
    %v27 = vld [vmem:[%s1 + $0x50] sm:$0xff]
    %v28 = vld [vmem:[%s1 + $0x58] sm:$0xff]
    %v29 = vld [vmem:[%s1 + $0x60] sm:$0xff]
    %v30 = vld [vmem:[%s1 + $0x68] sm:$0xff]
    %v31 = vld [vmem:[%s1 + $0x70] sm:$0xff]
    %v32 = vld [vmem:[%s1 + $0x78] sm:$0xff]
    %v33 = vld [vmem:[%s2] sm:$0x1]
    %v35 = vperm.slane %v33, 0
    %vm37 = vcmask 130048
    %v39 = vsel %vm37, %v15, 0
    %v42 = vsel %vm37, %v16, 0
    %v45 = vsel %vm37, %v17, 0
    %v48 = vsel %vm37, %v18, 0
    %v51 = vsel %vm37, %v19, 0
    %v54 = vsel %vm37, %v20, 0
    %v57 = vsel %vm37, %v21, 0
    %v60 = vsel %vm37, %v22, 0
    %v63 = vsel %vm37, %v23, 0
    %v66 = vsel %vm37, %v24, 0
    %v69 = vsel %vm37, %v25, 0
    %v72 = vsel %vm37, %v26, 0
    %v75 = vsel %vm37, %v27, 0
    %v78 = vsel %vm37, %v28, 0
    %v81 = vsel %vm37, %v29, 0
    %v84 = vsel %vm37, %v30, 0
    %v87 = vsel %vm37, %v31, 0
    %v90 = vsel %vm37, %v32, 0
    %92 = vmatpush.xpose.msra.mxu0 %v90
    %93 = vmatpush.xpose.msra.mxu0 %v87
    %94 = vmatpush.xpose.msra.mxu0 %v84
    %95 = vmatpush.xpose.msra.mxu0 %v81
    %96 = vmatpush.xpose.msra.mxu0 %v78
    %97 = vmatpush.xpose.msra.mxu0 %v75
    %98 = vmatpush.xpose.msra.mxu0 %v72
    %99 = vmatpush.xpose.msra.mxu0 %v69
    %100 = vmatpush.xpose.msra.mxu0 %v66
    %101 = vmatpush.xpose.msra.mxu0 %v63
    %102 = vmatpush.xpose.msra.mxu0 %v60
    %103 = vmatpush.xpose.msra.mxu0 %v57
    %104 = vmatpush.xpose.msra.mxu0 %v54
    %105 = vmatpush.xpose.msra.mxu0 %v51
    %106 = vmatpush.xpose.msra.mxu0 %v48
    %107 = vmatpush.xpose.msra.mxu0 %v45
    %108 = vmatmul.f32.gmra.mxu0 %v39
    %v109 = vpop.f32.mrf.mxu0
    %v110 = vadd.f32 %v35, %v109
    %111 = vmatmul.f32.gmra.mxu0 %v42
    %v112 = vpop.f32.mrf.mxu0
    %v113 = vadd.f32 %v35, %v112
    %114 = vdwg.mxu0
    %v115 = vmul.f32 %v110, 5.656854
    %v116 = vmul.f32 %v113, 5.656854
    %117 = vst [vmem:[#allocation2] sm:$0xff] %v115
    %118 = vst [vmem:[#allocation2 + $0x8] sm:$0xff] %v116
    // Predicated region
    $region14: #{tpu_custom_call.1} parent=1 // pred_check
      _
    $region15: #{tpu_custom_call.1} parent=1 // pred_check_branch
      %120 = sbr.rel (0) target = $region17
    $region16: #{tpu_custom_call.1} parent=1 // pred_region
      %122 = vsyncadd [#allocation3], 0
      %s123 = sshll.u32 [#allocation2], 4
      %s124 = int_to_ptr.vmem [resolvable:$true] %s123
      %s125 = sshll.u32 %s3, 4
      %s126 = int_to_ptr.hbm [resolvable:$true] %s125
      %131 = dma.vmem_to_hbm [thread:$0]  %s124, 256, %s126, [#allocation3], 128, 128, 8
    $region17: #{tpu_custom_call.1} parent=1 // pred_fallthru
      _
    // Predicated region
    $region18: #{tpu_custom_call.1} parent=1 // pred_check
      _
    $region19: #{tpu_custom_call.1} parent=1 // pred_check_branch
      %133 = sbr.rel (0) target = $region21
    $region20: #{tpu_custom_call.1} parent=1 // pred_region
      %135 = dma.done [#allocation3], 256
    $region21: #{tpu_custom_call.1} parent=1 // pred_fallthru
      _
    %136 = vsyncpa [#allocation3], 1

// kernel: tpu_custom_call.1
$region0: #{tpu_custom_call.1}
  #allocation0 [shape = 'u32[]', space=smem, size = 0x4, offset = 0x4, fixed_abs, tag = 'smem constant byte address 0x4 - core index']
  #allocation1 [shape = 'u32[72,128]{1,0:T(1,128)}', space=vmem, size = 0x9000, scoped, tag = 'internal scratch']
  %s0 = inlined_call_operand.vmem [shape: f32[16,16], index: 0, kind: input, shape index: {}]
  %s1 = inlined_call_operand.vmem [shape: f32[128,16], index: 1, kind: input, shape index: {}]
  %s2 = inlined_call_operand.vmem [shape: f32[1,128], index: 2, kind: input, shape index: {}]
  %s3 = inlined_call_operand.hbm [shape: f32[16,128], index: 3, kind: output, shape index: {}]
  %s4 = sld [smem:[#allocation0]]
  $region22: #{tpu_custom_call.1} parent=0
    _
  %s6 = ssub.s32 1, %s4
  %s7 = scalar_select 0, %s6, %s4
  $region1: #{tpu_custom_call.1} parent=0
    #allocation2 [shape = 'u8[8192]{0}', space=vmem, size = 0x2000, scoped, tag = 'output window, operand 0, single buffered']
    #allocation3 [shape = 's32[1]{0}', space=sflag, size = 0x4, scoped, tag = 'scoped memory for tpu_custom_call.1']
    %8 = vsyncpa [#allocation3], 0
    // Predicated region
    $region2: #{tpu_custom_call.1} parent=1 // pred_check
      _
    $region3: #{tpu_custom_call.1} parent=1 // pred_check_branch
      %10 = sbr.rel (0) target = $region5
    $region4: #{tpu_custom_call.1} parent=1 // pred_region
      _
    $region5: #{tpu_custom_call.1} parent=1 // pred_fallthru
      _
    // Predicated region
    $region6: #{tpu_custom_call.1} parent=1 // pred_check
      _
    $region7: #{tpu_custom_call.1} parent=1 // pred_check_branch
      %12 = sbr.rel (0) target = $region9
    $region8: #{tpu_custom_call.1} parent=1 // pred_region
      _
    $region9: #{tpu_custom_call.1} parent=1 // pred_fallthru
      _
    // Predicated region
    $region10: #{tpu_custom_call.1} parent=1 // pred_check
      _
    $region11: #{tpu_custom_call.1} parent=1 // pred_check_branch
      %14 = sbr.rel (0) target = $region13
    $region12: #{tpu_custom_call.1} parent=1 // pred_region
      _
    $region13: #{tpu_custom_call.1} parent=1 // pred_fallthru
      _
    %v15 = vld [vmem:[%s0] sm:$0xff]
    %v16 = vld [vmem:[%s0 + $0x8] sm:$0xff]
    %v17 = vld [vmem:[%s1] sm:$0xff]
    %v18 = vld [vmem:[%s1 + $0x8] sm:$0xff]
    %v19 = vld [vmem:[%s1 + $0x10] sm:$0xff]
    %v20 = vld [vmem:[%s1 + $0x18] sm:$0xff]
    %v21 = vld [vmem:[%s1 + $0x20] sm:$0xff]
    %v22 = vld [vmem:[%s1 + $0x28] sm:$0xff]
    %v23 = vld [vmem:[%s1 + $0x30] sm:$0xff]
    %v24 = vld [vmem:[%s1 + $0x38] sm:$0xff]
    %v25 = vld [vmem:[%s1 + $0x40] sm:$0xff]
    %v26 = vld [vmem:[%s1 + $0x48] sm:$0xff]
    %v27 = vld [vmem:[%s1 + $0x50] sm:$0xff]
    %v28 = vld [vmem:[%s1 + $0x58] sm:$0xff]
    %v29 = vld [vmem:[%s1 + $0x60] sm:$0xff]
    %v30 = vld [vmem:[%s1 + $0x68] sm:$0xff]
    %v31 = vld [vmem:[%s1 + $0x70] sm:$0xff]
    %v32 = vld [vmem:[%s1 + $0x78] sm:$0xff]
    %v33 = vld [vmem:[%s2] sm:$0x1]
    %v35 = vperm.slane %v33, 0
    %vm37 = vcmask 130048
    %v39 = vsel %vm37, %v15, 0
    %v42 = vsel %vm37, %v16, 0
    %v45 = vsel %vm37, %v17, 0
    %v48 = vsel %vm37, %v18, 0
    %v51 = vsel %vm37, %v19, 0
    %v54 = vsel %vm37, %v20, 0
    %v57 = vsel %vm37, %v21, 0
    %v60 = vsel %vm37, %v22, 0
    %v63 = vsel %vm37, %v23, 0
    %v66 = vsel %vm37, %v24, 0
    %v69 = vsel %vm37, %v25, 0
    %v72 = vsel %vm37, %v26, 0
    %v75 = vsel %vm37, %v27, 0
    %v78 = vsel %vm37, %v28, 0
    %v81 = vsel %vm37, %v29, 0
    %v84 = vsel %vm37, %v30, 0
    %v87 = vsel %vm37, %v31, 0
    %v90 = vsel %vm37, %v32, 0
    %92 = vmatpush.xpose.msra.mxu0 %v90
    %93 = vmatpush.xpose.msra.mxu0 %v87
    %94 = vmatpush.xpose.msra.mxu0 %v84
    %95 = vmatpush.xpose.msra.mxu0 %v81
    %96 = vmatpush.xpose.msra.mxu0 %v78
    %97 = vmatpush.xpose.msra.mxu0 %v75
    %98 = vmatpush.xpose.msra.mxu0 %v72
    %99 = vmatpush.xpose.msra.mxu0 %v69
    %100 = vmatpush.xpose.msra.mxu0 %v66
    %101 = vmatpush.xpose.msra.mxu0 %v63
    %102 = vmatpush.xpose.msra.mxu0 %v60
    %103 = vmatpush.xpose.msra.mxu0 %v57
    %104 = vmatpush.xpose.msra.mxu0 %v54
    %105 = vmatpush.xpose.msra.mxu0 %v51
    %106 = vmatpush.xpose.msra.mxu0 %v48
    %107 = vmatpush.xpose.msra.mxu0 %v45
    %108 = vmatmul.f32.gmra.mxu0 %v39
    %v109 = vpop.f32.mrf.mxu0
    %v110 = vadd.f32 %v35, %v109
    %111 = vmatmul.f32.gmra.mxu0 %v42
    %v112 = vpop.f32.mrf.mxu0
    %v113 = vadd.f32 %v35, %v112
    %114 = vdwg.mxu0
    %v115 = vmul.f32 %v110, 5.656854
    %v116 = vmul.f32 %v113, 5.656854
    %117 = vst [vmem:[#allocation2] sm:$0xff] %v115
    %118 = vst [vmem:[#allocation2 + $0x8] sm:$0xff] %v116
    // Predicated region
    $region14: #{tpu_custom_call.1} parent=1 // pred_check
      _
    $region15: #{tpu_custom_call.1} parent=1 // pred_check_branch
      %120 = sbr.rel (0) target = $region17
    $region16: #{tpu_custom_call.1} parent=1 // pred_region
      %122 = vsyncadd [#allocation3], 0
      %s123 = sshll.u32 [#allocation2], 4
      %s124 = int_to_ptr.vmem [resolvable:$true] %s123
      %s125 = sshll.u32 %s3, 4
      %s126 = int_to_ptr.hbm [resolvable:$true] %s125
      %131 = dma.vmem_to_hbm [thread:$0]  %s124, 256, %s126, [#allocation3], 128, 128, 8
    $region17: #{tpu_custom_call.1} parent=1 // pred_fallthru
      _
    // Predicated region
    $region18: #{tpu_custom_call.1} parent=1 // pred_check
      _
    $region19: #{tpu_custom_call.1} parent=1 // pred_check_branch
      %133 = sbr.rel (0) target = $region21
    $region20: #{tpu_custom_call.1} parent=1 // pred_region
      %135 = dma.done [#allocation3], 256
    $region21: #{tpu_custom_call.1} parent=1 // pred_fallthru
      _
    %136 = vsyncpa [#allocation3], 1

</llo_original>
